<compile_context>
chip_gen: v7x
topology: tpu7x:2x2x1
jax: 0.10.0
libtpu: 0.0.40
codegen_flags: <defaults>
</compile_context>

<pallas_src>
import math
import jax
import jax.numpy as jnp
from jax.experimental import pallas as pl
from jax.experimental.pallas import tpu as pltpu


def _round_up(x, m):
    return ((x + m - 1) // m) * m


# ---------------- stage 1: support = x @ W (computed once, bf16 out) ----------------
def _support_kernel(x_ref, w_ref, s_ref):
    s_ref[...] = jnp.dot(
        x_ref[...], w_ref[...], preferred_element_type=jnp.float32
    ).astype(s_ref.dtype)


# ---- stage 2 (support streamed in K tiles): out = adj @ support + b ----
def _aggregate_stream_kernel(adj_ref, s_ref, b_ref, out_ref):
    k = pl.program_id(1)

    @pl.when(k == 0)
    def _():
        out_ref[...] = jnp.zeros_like(out_ref)

    out_ref[...] += jnp.dot(
        adj_ref[...], s_ref[...], preferred_element_type=jnp.float32
    )

    @pl.when(k == pl.num_programs(1) - 1)
    def _():
        out_ref[...] += b_ref[...]


# ---- stage 2 (support VMEM-resident, fetched once): slice the K tile in-kernel ----
def _make_aggregate_resident_kernel(tile_k):
    def kernel(adj_ref, s_ref, b_ref, out_ref):
        k = pl.program_id(1)

        @pl.when(k == 0)
        def _():
            out_ref[...] = jnp.zeros_like(out_ref)

        k_start = pl.multiple_of(k * tile_k, tile_k)
        out_ref[...] += jnp.dot(
            adj_ref[...], s_ref[pl.ds(k_start, tile_k), :],
            preferred_element_type=jnp.float32,
        )

        @pl.when(k == pl.num_programs(1) - 1)
        def _():
            out_ref[...] += b_ref[...]

    return kernel


def gcn_emb_forward(x, adj, w1, b1):
    N, nfeat = x.shape
    nhid = w1.shape[1]
    f32, bf16 = jnp.float32, jnp.bfloat16

    # -------- generation-aware VMEM budget & default tiles --------
    vmem_cap = None
    try:
        info = pltpu.get_tpu_info()
        vmem_cap = getattr(info, "vmem_capacity_bytes", None)
    except Exception:
        vmem_cap = None
    if not vmem_cap:
        vmem_cap = 64 * 1024 * 1024                      # conservative (v7x physical)
    vmem_limit = min(int(vmem_cap * 3 // 4), 96 * 1024 * 1024)

    if vmem_cap >= 128 * 1024 * 1024:                    # v5e / v6e (128 MiB VMEM)
        tile_n_dft, tile_k_dft = 512, 2048
    else:                                                # v7x (64 MiB per TC)
        tile_n_dft, tile_k_dft = 256, 1024

    # -------- power-of-two tiles; tile_k is a multiple of tile_n --------
    # => N_p = round_up(N, tile_k).  Fixes the old lcm() padding cliff for awkward N.
    p2 = pl.next_power_of_2(max(N, 1))
    tile_n = max(8, min(tile_n_dft, p2))                 # row tile (sublane-aligned)
    tile_k = max(128, min(tile_k_dft, p2))               # contraction tile (lane-aligned)
    tile_k = max(tile_k, tile_n)
    N_p = _round_up(N, tile_k)

    # Even row-tile count load-balances the two v7x TensorCores on the parallel axis.
    if (N_p // tile_n) > 1 and (N_p // tile_n) % 2 == 1 and tile_n >= 16:
        tile_n //= 2

    nhid_p = _round_up(nhid, 128)                        # lane-dense output (unmasked vst)
    nfeat_p = _round_up(nfeat, 128)

    # -------- padding (adj padded straight into bf16: one half-width write pass) ----
    x_p = jnp.zeros((N_p, nfeat_p), f32).at[:N, :nfeat].set(x.astype(f32))
    w_p = jnp.zeros((nfeat_p, nhid_p), f32).at[:nfeat, :nhid].set(w1.astype(f32))
    b_p = jnp.zeros((1, nhid_p), f32).at[0, :nhid].set(b1.astype(f32).reshape(nhid))
    adj_p = jnp.zeros((N_p, N_p), bf16).at[:N, :N].set(adj.astype(bf16))

    # ---- stage 1: support = x @ W  (row-tiled over N, weight resident, bf16 out) ----
    support = pl.pallas_call(
        _support_kernel,
        out_shape=jax.ShapeDtypeStruct((N_p, nhid_p), bf16),
        grid_spec=pltpu.PrefetchScalarGridSpec(
            num_scalar_prefetch=0,
            grid=(N_p // tile_n,),
            in_specs=[
                pl.BlockSpec((tile_n, nfeat_p), lambda i: (i, 0)),
                pl.BlockSpec((nfeat_p, nhid_p), lambda i: (0, 0)),
            ],
            out_specs=pl.BlockSpec((tile_n, nhid_p), lambda i: (i, 0)),
        ),
        compiler_params=pltpu.CompilerParams(
            dimension_semantics=("parallel",),
            vmem_limit_bytes=vmem_limit,
        ),
    )(x_p, w_p)

    # ---- stage 2: out = adj @ support + b  (rows parallel, K arbitrary) ----
    n_row_tiles = N_p // tile_n
    n_k_tiles = N_p // tile_k

    # VMEM working set (Pallas double-buffers every block by default).
    resident_bytes = (
        2 * N_p * nhid_p * 2        # support fully resident (bf16)
        + 2 * tile_n * tile_k * 2   # adj tile (bf16)
        + 2 * tile_n * nhid_p * 4   # out tile (f32 accumulator)
        + 2 * nhid_p * 4            # bias
    )
    support_resident = resident_bytes <= vmem_limit - 4 * 1024 * 1024

    if support_resident:
        agg_kernel = _make_aggregate_resident_kernel(tile_k)
        support_spec = pl.BlockSpec((N_p, nhid_p), lambda i, k: (0, 0))
        support_read_bytes = N_p * nhid_p * 2                     # fetched once
    else:
        agg_kernel = _aggregate_stream_kernel
        support_spec = pl.BlockSpec((tile_k, nhid_p), lambda i, k: (k, 0))
        support_read_bytes = n_row_tiles * N_p * nhid_p * 2       # re-streamed per row tile

    cost = pl.CostEstimate(
        flops=2 * N_p * N_p * nhid_p,
        transcendentals=0,
        bytes_accessed=2 * N_p * N_p + support_read_bytes + 4 * N_p * nhid_p + 4 * nhid_p,
    )

    out_p = pl.pallas_call(
        agg_kernel,
        out_shape=jax.ShapeDtypeStruct((N_p, nhid_p), f32),
        grid_spec=pltpu.PrefetchScalarGridSpec(
            num_scalar_prefetch=0,
            grid=(n_row_tiles, n_k_tiles),
            in_specs=[
                pl.BlockSpec((tile_n, tile_k), lambda i, k: (i, k)),
                support_spec,
                pl.BlockSpec((1, nhid_p), lambda i, k: (0, 0)),
            ],
            out_specs=pl.BlockSpec((tile_n, nhid_p), lambda i, k: (i, 0)),
        ),
        compiler_params=pltpu.CompilerParams(
            dimension_semantics=("parallel", "arbitrary"),
            vmem_limit_bytes=vmem_limit,
        ),
        cost_estimate=cost,
    )(adj_p, support, b_p)

    return out_p[:N, :nhid]


if __name__ == "__main__":
    # Small shapes consistent with the module: N nodes, nfeat input features, nhid hidden.
    N, nfeat, nhid = 64, 32, 32

    key = jax.random.PRNGKey(0)
    kx, kadj, kw, kb = jax.random.split(key, 4)

    x = jax.random.normal(kx, (N, nfeat), dtype=jnp.float32)

    # deterministic dense "adjacency" (spmm on a dense matrix == mm), row-normalized
    adj_raw = (jax.random.uniform(kadj, (N, N)) > 0.7).astype(jnp.float32)
    adj_raw = adj_raw + jnp.eye(N, dtype=jnp.float32)
    adj = adj_raw / jnp.sum(adj_raw, axis=1, keepdims=True)

    # GraphConvolution.reset_parameters: uniform(-stdv, stdv), stdv = 1/sqrt(out_features)
    stdv = 1.0 / math.sqrt(nhid)
    w1 = jax.random.uniform(kw, (nfeat, nhid), minval=-stdv, maxval=stdv,
                            dtype=jnp.float32)
    b1 = jax.random.uniform(kb, (nhid,), minval=-stdv, maxval=stdv,
                            dtype=jnp.float32)

    out = gcn_emb_forward(x, adj, w1, b1)
    out = jax.block_until_ready(out)

    # reference check in plain JAX (adj/support are bf16 in the kernel with f32
    # accumulation, so the check is tolerance-loosened vs. the pure-f32 reference)
    ref = adj @ (x @ w1) + b1
    assert out.shape == (N, nhid)
    assert jnp.allclose(out, ref, atol=2e-2, rtol=2e-2)

    print("KERNEL_OK")
</pallas_src>

<mosaic_0001>
module attributes {stable_mosaic.version = 11 : i64} {
  func.func @_support_kernel(%arg0: i32, %arg1: memref<64x128xf32, #tpu.memory_space<vmem>>, %arg2: memref<128x128xf32, #tpu.memory_space<vmem>>, %arg3: memref<64x128xbf16, #tpu.memory_space<vmem>>) attributes {dimension_semantics = [#tpu.dimension_semantics<parallel>], iteration_bounds = array<i64: 2>, scalar_prefetch = 0 : i64, scratch_operands = 0 : i64, tpu.core_type = #tpu.core_type<tc>, window_params = [{transform_indices = @transform_0, window_bounds = array<i64: 64, 128>}, {pipeline_mode = #tpu.pipeline_mode<synchronous>, transform_indices = @transform_1, window_bounds = array<i64: 128, 128>}, {transform_indices = @transform_2, window_bounds = array<i64: 64, 128>}]} {
    %c0 = arith.constant 0 : index
    %c0_0 = arith.constant 0 : index
    %0 = vector.load %arg1[%c0, %c0_0] : memref<64x128xf32, #tpu.memory_space<vmem>>, vector<64x128xf32>
    %c0_1 = arith.constant 0 : index
    %c0_2 = arith.constant 0 : index
    %1 = vector.load %arg2[%c0_1, %c0_2] : memref<128x128xf32, #tpu.memory_space<vmem>>, vector<128x128xf32>
    %cst = arith.constant dense<0.000000e+00> : vector<64x128xf32>
    %2 = tpu.matmul %0, %1, %cst {dimension_numbers = #tpu.dot_dimension_numbers<[1], [0], [0], [1], [0, 0, 1, 1], [], []>} : vector<64x128xf32>, vector<128x128xf32>, vector<64x128xf32> -> vector<64x128xf32>
    %3 = arith.truncf %2 : vector<64x128xf32> to vector<64x128xbf16>
    %c0_3 = arith.constant 0 : index
    %c0_4 = arith.constant 0 : index
    %4 = vector.load %arg3[%c0_3, %c0_4] : memref<64x128xbf16, #tpu.memory_space<vmem>>, vector<64x128xbf16>
    tpu.vector_store %arg3[%c0_3, %c0_4], %3 {strides = array<i32>} : memref<64x128xbf16, #tpu.memory_space<vmem>>, vector<64x128xbf16>,
    return
  }
  func.func @transform_0(%arg0: i32) -> (i32, i32) {
    %c0_i32 = arith.constant 0 : i32
    %c0_i32_0 = arith.constant 0 : i32
    return %arg0, %c0_i32 : i32, i32
  }
  func.func @transform_1(%arg0: i32) -> (i32, i32) {
    %c0_i32 = arith.constant 0 : i32
    %c0_i32_0 = arith.constant 0 : i32
    %c0_i32_1 = arith.constant 0 : i32
    return %c0_i32, %c0_i32_0 : i32, i32
  }
  func.func @transform_2(%arg0: i32) -> (i32, i32) {
    %c0_i32 = arith.constant 0 : i32
    %c0_i32_0 = arith.constant 0 : i32
    return %arg0, %c0_i32 : i32, i32
  }
}

</mosaic_0001>

<llo_original>
// kernel: tpu_custom_call.1
$region0: #{tpu_custom_call.1}
  #allocation0 [shape = 'u32[]', space=smem, size = 0x4, offset = 0x4, fixed_abs, tag = 'smem constant byte address 0x4 - core index']
  #allocation1 [shape = 'u32[144,128]{1,0:T(1,128)}', space=vmem, size = 0x12000, scoped, tag = 'internal scratch']
  %s0 = inlined_call_operand.hbm [shape: f32[128,128], index: 0, kind: input, shape index: {}]
  %s1 = inlined_call_operand.hbm [shape: f32[128,128], index: 1, kind: input, shape index: {}]
  %s2 = inlined_call_operand.hbm [shape: bf16[128,128], index: 2, kind: output, shape index: {}]
  %s3 = sld [smem:[#allocation0]]
  $region49: #{tpu_custom_call.1} parent=0
    _
  %s5 = ssub.s32 1, %s3
  %s6 = scalar_select 0, %s5, %s3
  $region1: #{tpu_custom_call.1} parent=0
    #allocation2 [shape = 'u8[65536]{0}', space=vmem, size = 0x10000, scoped, tag = 'input window, operand 0']
    #allocation3 [shape = 's32[2]{0}', space=sflag, size = 0x8, scoped, tag = 'scoped memory for tpu_custom_call.1']
    #allocation4 [shape = 's32[2]{0}', space=sflag, size = 0x8, scoped, tag = 'scoped memory for tpu_custom_call.1']
    #allocation5 [shape = 'u8[65536]{0}', space=vmem, size = 0x10000, scoped, tag = 'input window, operand 1, single buffered']
    #allocation6 [shape = 's32[1]{0}', space=sflag, size = 0x4, scoped, tag = 'scoped memory for tpu_custom_call.1']
    #allocation7 [shape = 'u8[32768]{0}', space=vmem, size = 0x8000, scoped, tag = 'output window, operand 0']
    %7 = vsyncpa [#allocation3], 0
    %s8 = scalar_lea.sflag [#allocation3], 1
    %9 = vsyncpa %s8, 0
    %10 = vsyncpa [#allocation6], 0
    %11 = vsyncpa [#allocation4], 0
    %s12 = scalar_lea.sflag [#allocation4], 1
    %13 = vsyncpa %s12, 0
    loop: start=0, step=1, limit=4
    $region2: #{tpu_custom_call.1} parent=1 // loop_pre_header
      _
    $region3: #{tpu_custom_call.1} parent=1 // loop_header
      %s15 = sphi 0, %s19
      %p16 = scmp.ge.s32.totalorder %s15, 4
      %s25 = sphi 0, %s27
      %s28 = sphi 0, %s25
      %s29 = sphi 0, %s28
      %s45 = sphi 0, %s29
      %s49 = sphi 0, %s49
      %s51 = sphi 0, %s49
      %s52 = sphi 0, %s51
      %s66 = sphi 0, %s52
      %s72 = sphi 0, %s74
      %s75 = sphi 0, %s72
      %s76 = sphi 0, %s75
      %s92 = sphi 0, %s76
    $region4: #{tpu_custom_call.1} parent=1 // loop_header_branch
      %18 = sbr.rel (%p16) target = $region8
    $region5: #{tpu_custom_call.1} parent=1 // loop_body
      %s20 = ssub.s32 %s15, 1
      %s21 = ssub.s32 %s15, 2
      %s22 = sadd.s32 %s15, 1
      %s23 = ssub.s32 %s15, %s22
      %p24 = scmp.eq.s32.totalorder %s23, 0
      %s26 = sadd.s32 %s25, 1
      %s27 = scalar_select %p24, %s25, %s26
      %p30 = pneg %p24
      %p31 = scmp.eq.s32.totalorder %s15, 1
      %p32 = por %p30, %p31
      %p33 = scmp.ne.s32.totalorder %s25, %s28
      %p34 = scmp.eq.s32.totalorder %s15, 0
      %p35 = por %p33, %p34
      %p36 = scmp.ne.s32.totalorder %s25, %s28
      %p37 = scmp.eq.s32.totalorder %s20, 1
      %p38 = por %p36, %p37
      %p39 = scmp.ne.s32.totalorder %s28, %s29
      %p40 = scmp.eq.s32.totalorder %s20, 0
      %p41 = por %p39, %p40
      %p42 = scmp.ne.s32.totalorder %s28, %s29
      %p43 = scmp.eq.s32.totalorder %s21, 1
      %p44 = por %p42, %p43
      %p46 = scmp.ne.s32.totalorder %s29, %s45
      %p47 = scmp.eq.s32.totalorder %s21, 0
      %p48 = por %p46, %p47
      %s50 = sadd.s32 %s49, 1
      %p53 = scmp.eq.s32.totalorder %s15, 1
      %p54 = scmp.ne.s32.totalorder %s49, %s51
      %p55 = scmp.eq.s32.totalorder %s15, 0
      %p56 = por %p54, %p55
      %p57 = scmp.ne.s32.totalorder %s49, %s51
      %p58 = scmp.eq.s32.totalorder %s20, 1
      %p59 = por %p57, %p58
      %p60 = scmp.ne.s32.totalorder %s51, %s52
      %p61 = scmp.eq.s32.totalorder %s20, 0
      %p62 = por %p60, %p61
      %p63 = scmp.ne.s32.totalorder %s51, %s52
      %p64 = scmp.eq.s32.totalorder %s21, 1
      %p65 = por %p63, %p64
      %p67 = scmp.ne.s32.totalorder %s52, %s66
      %p68 = scmp.eq.s32.totalorder %s21, 0
      %p69 = por %p67, %p68
      %s70 = ssub.s32 %s15, %s22
      %p71 = scmp.eq.s32.totalorder %s70, 0
      %s73 = sadd.s32 %s72, 1
      %s74 = scalar_select %p71, %s72, %s73
      %p77 = pneg %p71
      %p78 = scmp.eq.s32.totalorder %s15, 1
      %p79 = por %p77, %p78
      %p80 = scmp.ne.s32.totalorder %s72, %s75
      %p81 = scmp.eq.s32.totalorder %s15, 0
      %p82 = por %p80, %p81
      %p83 = scmp.ne.s32.totalorder %s72, %s75
      %p84 = scmp.eq.s32.totalorder %s20, 1
      %p85 = por %p83, %p84
      %p86 = scmp.ne.s32.totalorder %s75, %s76
      %p87 = scmp.eq.s32.totalorder %s20, 0
      %p88 = por %p86, %p87
      %p89 = scmp.ne.s32.totalorder %s75, %s76
      %p90 = scmp.eq.s32.totalorder %s21, 1
      %p91 = por %p89, %p90
      %p93 = scmp.ne.s32.totalorder %s76, %s92
      %p94 = scmp.eq.s32.totalorder %s21, 0
      %p95 = por %p93, %p94
      %p96 = scmp.le.s32.totalorder 1, %s15
      %p97 = scmp.lt.s32.totalorder %s15, 3
      %p98 = pnand %p96, %p97
      %p99 = pneg %p98
      // Predicated region
      $region9: #{tpu_custom_call.1} parent=5 // pred_check
        _
      $region10: #{tpu_custom_call.1} parent=5 // pred_check_branch
        %101 = sbr.rel (%p98) target = $region12
      $region11: #{tpu_custom_call.1} parent=5 // pred_region
        %s102 = ssub.s32 %s15, 1
        // Predicated region
        $region13: #{tpu_custom_call.1} parent=11 // pred_check
          %p103 = pneg %p62
        $region14: #{tpu_custom_call.1} parent=11 // pred_check_branch
          %105 = sbr.rel (%p103) target = $region16
        $region15: #{tpu_custom_call.1} parent=11 // pred_region
          %s107 = ssub.s32 2048, 2048
          %108 = vsyncadd [#allocation6], %s107
          %s109 = sshll.u32 [#allocation5], 4
          %s110 = int_to_ptr.vmem [resolvable:$true] %s109
          %115 = dma.hbm_to_vmem [thread:$0]  %s1, 2048, %s110, [#allocation6], 128, 128, 8
        $region16: #{tpu_custom_call.1} parent=11 // pred_fallthru
          _
      $region12: #{tpu_custom_call.1} parent=5 // pred_fallthru
        _
      %p116 = scmp.lt.s32.totalorder %s15, 2
      // Predicated region
      $region17: #{tpu_custom_call.1} parent=5 // pred_check
        %p117 = pneg %p116
      $region18: #{tpu_custom_call.1} parent=5 // pred_check_branch
        %119 = sbr.rel (%p117) target = $region20
      $region19: #{tpu_custom_call.1} parent=5 // pred_region
        // Predicated region
        $region21: #{tpu_custom_call.1} parent=19 // pred_check
          %p120 = pneg %p35
        $region22: #{tpu_custom_call.1} parent=19 // pred_check_branch
          %122 = sbr.rel (%p120) target = $region24
        $region23: #{tpu_custom_call.1} parent=19 // pred_region
          %s123 = sand.u32 %s25, 1
          %s124 = scalar_lea.sflag [#allocation3], %s123
          %s125 = sand.u32 %s25, 1
          %s126 = smul.addr %s125, 64
          %s127 = scalar_lea.vmem [#allocation2], %s126
          %s128 = smul.u32 8, %s15
          %s130 = ssub.s32 1024, 1024
          %131 = vsyncadd %s124, %s130
          %s132 = smul.addr %s128, 128
          %s133 = scalar_lea.hbm %s0, %s132
          %s134 = sshll.u32 %s127, 4
          %s135 = int_to_ptr.vmem [resolvable:$true] %s134
          %140 = dma.hbm_to_vmem [thread:$0]  %s133, 1024, %s135, %s124, 128, 128, 8
        $region24: #{tpu_custom_call.1} parent=19 // pred_fallthru
          _
      $region20: #{tpu_custom_call.1} parent=5 // pred_fallthru
        _
      %p141 = scmp.le.s32.totalorder 1, %s15
      %p142 = scmp.lt.s32.totalorder %s15, 3
      %p143 = pnand %p141, %p142
      %p144 = pneg %p143
      // Predicated region
      $region25: #{tpu_custom_call.1} parent=5 // pred_check
        _
      $region26: #{tpu_custom_call.1} parent=5 // pred_check_branch
        %146 = sbr.rel (%p143) target = $region28
      $region27: #{tpu_custom_call.1} parent=5 // pred_region
        %s147 = ssub.s32 %s15, 1
        %s148 = sand.u32 %s28, 1
        %s149 = scalar_lea.sflag [#allocation3], %s148
        %s150 = sand.u32 %s28, 1
        %s151 = smul.addr %s150, 64
        %s152 = scalar_lea.vmem [#allocation2], %s151
        // Predicated region
        $region29: #{tpu_custom_call.1} parent=27 // pred_check
          %p153 = pneg %p41
        $region30: #{tpu_custom_call.1} parent=27 // pred_check_branch
          %155 = sbr.rel (%p153) target = $region32
        $region31: #{tpu_custom_call.1} parent=27 // pred_region
          %156 = dma.done %s149, 1024
        $region32: #{tpu_custom_call.1} parent=27 // pred_fallthru
          _
        // Predicated region
        $region33: #{tpu_custom_call.1} parent=27 // pred_check
          %p157 = pneg %p62
        $region34: #{tpu_custom_call.1} parent=27 // pred_check_branch
          %159 = sbr.rel (%p157) target = $region36
        $region35: #{tpu_custom_call.1} parent=27 // pred_region
          %160 = dma.done [#allocation6], 2048
        $region36: #{tpu_custom_call.1} parent=27 // pred_fallthru
          _
        %s161 = sand.u32 %s28, 1
        %s162 = scalar_lea.sflag [#allocation3], %s161
        %s163 = sand.u32 %s28, 1
        %s164 = smul.addr %s163, 64
        %s165 = scalar_lea.vmem [#allocation2], %s164
        %p166 = pneg %p41
        %p167 = pneg %p38
        %p168 = pneg %p62
        %p169 = pneg %p59
        %p170 = pneg %p88
        %p171 = pneg %p85
        %s172 = sand.u32 %s75, 1
        %s173 = scalar_lea.sflag [#allocation4], %s172
        %s174 = sand.u32 %s75, 1
        %s175 = smul.addr %s174, 32
        %s176 = scalar_lea.vmem [#allocation7], %s175
        %s177 = smul.u32 8, %s20
        %s178 = smul.u32 8, %s20
        %v179 = vld [vmem:[%s152] sm:$0xff]
        %v180 = vld [vmem:[%s152 + $0x8] sm:$0xff]
        %v181 = vld [vmem:[%s152 + $0x10] sm:$0xff]
        %v182 = vld [vmem:[%s152 + $0x18] sm:$0xff]
        %v183 = vld [vmem:[%s152 + $0x20] sm:$0xff]
        %v184 = vld [vmem:[%s152 + $0x28] sm:$0xff]
        %v185 = vld [vmem:[%s152 + $0x30] sm:$0xff]
        %v186 = vld [vmem:[%s152 + $0x38] sm:$0xff]
        %v187 = vld [vmem:[#allocation5] sm:$0xff]
        %v188 = vld [vmem:[#allocation5 + $0x8] sm:$0xff]
        %v189 = vld [vmem:[#allocation5 + $0x10] sm:$0xff]
        %v190 = vld [vmem:[#allocation5 + $0x18] sm:$0xff]
        %v191 = vld [vmem:[#allocation5 + $0x20] sm:$0xff]
        %v192 = vld [vmem:[#allocation5 + $0x28] sm:$0xff]
        %v193 = vld [vmem:[#allocation5 + $0x30] sm:$0xff]
        %v194 = vld [vmem:[#allocation5 + $0x38] sm:$0xff]
        %v195 = vld [vmem:[#allocation5 + $0x40] sm:$0xff]
        %v196 = vld [vmem:[#allocation5 + $0x48] sm:$0xff]
        %v197 = vld [vmem:[#allocation5 + $0x50] sm:$0xff]
        %v198 = vld [vmem:[#allocation5 + $0x58] sm:$0xff]
        %v199 = vld [vmem:[#allocation5 + $0x60] sm:$0xff]
        %v200 = vld [vmem:[#allocation5 + $0x68] sm:$0xff]
        %v201 = vld [vmem:[#allocation5 + $0x70] sm:$0xff]
        %v202 = vld [vmem:[#allocation5 + $0x78] sm:$0xff]
        %203 = vmatprep.subr.mxu0 0.0
        %204 = vmatpush1.msra.mxu0 %v187
        %205 = vmatprep.subr.mxu0 0.0
        %206 = vmatpush1.msra.mxu0 %v188
        %207 = vmatprep.subr.mxu0 0.0
        %208 = vmatpush1.msra.mxu0 %v189
        %209 = vmatprep.subr.mxu0 0.0
        %210 = vmatpush1.msra.mxu0 %v190
        %211 = vmatprep.subr.mxu0 0.0
        %212 = vmatpush1.msra.mxu0 %v191
        %213 = vmatprep.subr.mxu0 0.0
        %214 = vmatpush1.msra.mxu0 %v192
        %215 = vmatprep.subr.mxu0 0.0
        %216 = vmatpush1.msra.mxu0 %v193
        %217 = vmatprep.subr.mxu0 0.0
        %218 = vmatpush1.msra.mxu0 %v194
        %219 = vmatprep.subr.mxu0 0.0
        %220 = vmatpush1.msra.mxu0 %v195
        %221 = vmatprep.subr.mxu0 0.0
        %222 = vmatpush1.msra.mxu0 %v196
        %223 = vmatprep.subr.mxu0 0.0
        %224 = vmatpush1.msra.mxu0 %v197
        %225 = vmatprep.subr.mxu0 0.0
        %226 = vmatpush1.msra.mxu0 %v198
        %227 = vmatprep.subr.mxu0 0.0
        %228 = vmatpush1.msra.mxu0 %v199
        %229 = vmatprep.subr.mxu0 0.0
        %230 = vmatpush1.msra.mxu0 %v200
        %231 = vmatprep.subr.mxu0 0.0
        %232 = vmatpush1.msra.mxu0 %v201
        %233 = vmatprep.subr.mxu0 0.0
        %234 = vmatpush1.msra.mxu0 %v202
        %235 = vmatprep.subr.mxu0 0.0
        %236 = vmatpush1.msra.mxu0 0.0
        %237 = vmatprep.subr.mxu0 0.0
        %238 = vmatpush1.msra.mxu0 0.0
        %239 = vmatprep.subr.mxu0 0.0
        %240 = vmatpush1.msra.mxu0 0.0
        %241 = vmatprep.subr.mxu0 0.0
        %242 = vmatpush1.msra.mxu0 0.0
        %243 = vmatprep.subr.mxu0 0.0
        %244 = vmatpush1.msra.mxu0 0.0
        %245 = vmatprep.subr.mxu0 0.0
        %246 = vmatpush1.msra.mxu0 0.0
        %247 = vmatprep.subr.mxu0 0.0
        %248 = vmatpush1.msra.mxu0 0.0
        %249 = vmatprep.subr.mxu0 0.0
        %250 = vmatpush1.msra.mxu0 0.0
        %251 = vmatprep.subr.mxu0 0.0
        %252 = vmatpush1.msra.mxu0 0.0
        %253 = vmatprep.subr.mxu0 0.0
        %254 = vmatpush1.msra.mxu0 0.0
        %255 = vmatprep.subr.mxu0 0.0
        %256 = vmatpush1.msra.mxu0 0.0
        %257 = vmatprep.subr.mxu0 0.0
        %258 = vmatpush1.msra.mxu0 0.0
        %259 = vmatprep.subr.mxu0 0.0
        %260 = vmatpush1.msra.mxu0 0.0
        %261 = vmatprep.subr.mxu0 0.0
        %262 = vmatpush1.msra.mxu0 0.0
        %263 = vmatprep.subr.mxu0 0.0
        %264 = vmatpush1.msra.mxu0 0.0
        %265 = vmatprep.subr.mxu0 0.0
        %266 = vmatpush1.msra.mxu0 0.0
        %267 = vmatprep.mubr.f32.mxu0 0.0
        %268 = vmatmul.mubr.f32.gmra.mrb[0].mxu0 %v179
        %v269 = vpop.f32.mrb[0].mxu0
        %v270 = vadd.f32 0.0, %v269
        %v271 = vpop.f32.mrb[0].mxu0
        %272 = vmatprep.mubr.f32.mxu0 0.0
        %273 = vmatmul.mubr.f32.gmra.mrb[0].mxu0 %v180
        %v274 = vpop.f32.mrb[0].mxu0
        %v275 = vadd.f32 0.0, %v274
        %v276 = vpop.f32.mrb[0].mxu0
        %277 = vmatprep.mubr.f32.mxu0 0.0
        %278 = vmatmul.mubr.f32.gmra.mrb[0].mxu0 %v181
        %v279 = vpop.f32.mrb[0].mxu0
        %v280 = vadd.f32 0.0, %v279
        %v281 = vpop.f32.mrb[0].mxu0
        %282 = vmatprep.mubr.f32.mxu0 0.0
        %283 = vmatmul.mubr.f32.gmra.mrb[0].mxu0 %v182
        %v284 = vpop.f32.mrb[0].mxu0
        %v285 = vadd.f32 0.0, %v284
        %v286 = vpop.f32.mrb[0].mxu0
        %287 = vmatprep.mubr.f32.mxu0 0.0
        %288 = vmatmul.mubr.f32.gmra.mrb[0].mxu0 %v183
        %v289 = vpop.f32.mrb[0].mxu0
        %v290 = vadd.f32 0.0, %v289
        %v291 = vpop.f32.mrb[0].mxu0
        %292 = vmatprep.mubr.f32.mxu0 0.0
        %293 = vmatmul.mubr.f32.gmra.mrb[0].mxu0 %v184
        %v294 = vpop.f32.mrb[0].mxu0
        %v295 = vadd.f32 0.0, %v294
        %v296 = vpop.f32.mrb[0].mxu0
        %297 = vmatprep.mubr.f32.mxu0 0.0
        %298 = vmatmul.mubr.f32.gmra.mrb[0].mxu0 %v185
        %v299 = vpop.f32.mrb[0].mxu0
        %v300 = vadd.f32 0.0, %v299
        %v301 = vpop.f32.mrb[0].mxu0
        %302 = vmatprep.mubr.f32.mxu0 0.0
        %303 = vmatmul.mubr.f32.gmra.mrb[0].mxu0 %v186
        %v304 = vpop.f32.mrb[0].mxu0
        %v305 = vadd.f32 0.0, %v304
        %v306 = vpop.f32.mrb[0].mxu0
        %307 = vdwg.mxu0
        %v308 = vpack.c.bf16 %v275, %v270
        %v309 = vpack.c.bf16 %v285, %v280
        %v310 = vpack.c.bf16 %v295, %v290
        %v311 = vpack.c.bf16 %v305, %v300
        %v316 = vunpack.c.l.b16 %v308
        %v317 = vunpack.c.h.b16 %v308
        %v318 = vunpack.c.l.b16 %v309
        %v319 = vunpack.c.h.b16 %v309
        %v320 = vunpack.c.l.b16 %v310
        %v321 = vunpack.c.h.b16 %v310
        %v322 = vunpack.c.l.b16 %v311
        %v323 = vunpack.c.h.b16 %v311
        %v324 = vpack.c.b16 %v316, %v316
        %v325 = vpack.c.b16 %v317, %v317
        %v326 = vpack.c.b16 %v318, %v318
        %v327 = vpack.c.b16 %v319, %v319
        %v328 = vpack.c.b16 %v320, %v320
        %v329 = vpack.c.b16 %v321, %v321
        %v330 = vpack.c.b16 %v322, %v322
        %v331 = vpack.c.b16 %v323, %v323
        %340 = vst [vmem:[%s176] sm:$0xf] %v324
        %341 = vst [vmem:[%s176 + $0x4] sm:$0xf] %v325
        %342 = vst [vmem:[%s176 + $0x8] sm:$0xf] %v326
        %343 = vst [vmem:[%s176 + $0xc] sm:$0xf] %v327
        %344 = vst [vmem:[%s176 + $0x10] sm:$0xf] %v328
        %345 = vst [vmem:[%s176 + $0x14] sm:$0xf] %v329
        %346 = vst [vmem:[%s176 + $0x18] sm:$0xf] %v330
        %347 = vst [vmem:[%s176 + $0x1c] sm:$0xf] %v331
        %s348 = sand.u32 %s75, 1
        %s349 = scalar_lea.sflag [#allocation4], %s348
        %s350 = sand.u32 %s75, 1
        %s351 = smul.addr %s350, 32
        %s352 = scalar_lea.vmem [#allocation7], %s351
        // Predicated region
        $region37: #{tpu_custom_call.1} parent=27 // pred_check
          %p353 = pneg %p85
        $region38: #{tpu_custom_call.1} parent=27 // pred_check_branch
          %355 = sbr.rel (%p353) target = $region40
        $region39: #{tpu_custom_call.1} parent=27 // pred_region
          %s356 = smul.u32 8, %s20
          %s358 = ssub.s32 512, 512
          %359 = vsyncadd %s349, %s358
          %s360 = smul.addr %s356, 64
          %s361 = scalar_lea.hbm %s2, %s360
          %s362 = sshll.u32 %s352, 4
          %s363 = int_to_ptr.vmem [resolvable:$true] %s362
          %368 = dma.vmem_to_hbm [thread:$0]  %s363, 512, %s361, %s349, 64, 64, 4
        $region40: #{tpu_custom_call.1} parent=27 // pred_fallthru
          _
      $region28: #{tpu_custom_call.1} parent=5 // pred_fallthru
        _
      %p369 = scmp.le.s32.totalorder 2, %s15
      // Predicated region
      $region41: #{tpu_custom_call.1} parent=5 // pred_check
        %p370 = pneg %p369
      $region42: #{tpu_custom_call.1} parent=5 // pred_check_branch
        %372 = sbr.rel (%p370) target = $region44
      $region43: #{tpu_custom_call.1} parent=5 // pred_region
        %s373 = ssub.s32 %s15, 2
        // Predicated region
        $region45: #{tpu_custom_call.1} parent=43 // pred_check
          %p374 = pneg %p91
        $region46: #{tpu_custom_call.1} parent=43 // pred_check_branch
          %376 = sbr.rel (%p374) target = $region48
        $region47: #{tpu_custom_call.1} parent=43 // pred_region
          %s377 = sand.u32 %s76, 1
          %s378 = scalar_lea.sflag [#allocation4], %s377
          %s379 = sand.u32 %s76, 1
          %s380 = smul.addr %s379, 32
          %s381 = scalar_lea.vmem [#allocation7], %s380
          %382 = dma.done %s378, 512
        $region48: #{tpu_custom_call.1} parent=43 // pred_fallthru
          _
      $region44: #{tpu_custom_call.1} parent=5 // pred_fallthru
        _
    $region6: #{tpu_custom_call.1} parent=1 // loop_footer
      %s19 = sadd.s32 1, %s15
    $region7: #{tpu_custom_call.1} parent=1 // loop_footer_branch
      %14 = sbr.rel target = $region3
    $region8: #{tpu_custom_call.1} parent=1 // loop_exit
      _
    %383 = vsyncpa [#allocation3], 1
    %s384 = scalar_lea.sflag [#allocation3], 1
    %385 = vsyncpa %s384, 1
    %386 = vsyncpa [#allocation6], 1
    %387 = vsyncpa [#allocation4], 1
    %s388 = scalar_lea.sflag [#allocation4], 1
    %389 = vsyncpa %s388, 1

</llo_original>
